<compile_context>
chip_gen: v5e
topology: v5e:2x2
jax: 0.10.0
libtpu: 0.0.40
codegen_flags: <defaults>
</compile_context>

<pallas_src>
import functools

import jax
import jax.numpy as jnp
from jax.experimental import pallas as pl
from jax.experimental.pallas import tpu as pltpu


# ----------------------------------------------------------------------------
# Kernels
# ----------------------------------------------------------------------------
def _swim_kernel_single_k(x_ref, w_ref, b_ref, o_ref, *, mxu_dtype):
    # x_ref: (tm, K)   w_ref: (K, tn) already in mxu_dtype
    # b_ref: (1, tn) f32   o_ref: (tm, tn)
    x = x_ref[...]
    if x.dtype != mxu_dtype:
        x = x.astype(mxu_dtype)
    z = jnp.dot(x, w_ref[...], preferred_element_type=jnp.float32)
    o_ref[...] = jnp.tanh(z + b_ref[...]).astype(o_ref.dtype)


def _swim_kernel_multi_k(x_ref, w_ref, b_ref, o_ref, acc_ref, *, mxu_dtype):
    # Same as above, with a K (reduction) grid axis and an f32 VMEM accumulator.
    k = pl.program_id(2)

    @pl.when(k == 0)
    def _init():
        acc_ref[...] = jnp.zeros_like(acc_ref)

    x = x_ref[...]
    if x.dtype != mxu_dtype:
        x = x.astype(mxu_dtype)
    acc_ref[...] += jnp.dot(x, w_ref[...], preferred_element_type=jnp.float32)

    @pl.when(k == pl.num_programs(2) - 1)
    def _finalize():
        o_ref[...] = jnp.tanh(acc_ref[...] + b_ref[...]).astype(o_ref.dtype)


# ----------------------------------------------------------------------------
# Wrapper
# ----------------------------------------------------------------------------
def _round_up(v, m):
    return ((v + m - 1) // m) * m


def _balanced_tile(dim, t_max, multiple):
    """Tile size: ~dim/ntiles rounded up to `multiple` (caps padding waste)."""
    ntiles = pl.cdiv(dim, t_max)
    return _round_up(pl.cdiv(dim, ntiles), multiple)


def swim_block_forward(x, weights, biases, *, tm_max=512, tn_max=512,
                       tk_max=512, mxu_dtype=None):
    """Forward pass of BaseTorchBlock: tanh(x @ weights.T + biases.T).

    x:       (batch, input_dimension)
    weights: (layer_width, input_dimension)   -- module's native buffer layout
    biases:  (layer_width, 1)
    mxu_dtype: dtype fed to the MXU (e.g. jnp.bfloat16, accumulation stays f32).
               Kept opt-in: default follows x.dtype (see correctness notes).
    returns: (batch, layer_width) in x.dtype
    """
    batch, input_dim = x.shape
    layer_width = weights.shape[0]
    assert weights.shape == (layer_width, input_dim)
    assert biases.shape == (layer_width, 1)

    out_dtype = x.dtype
    mxu_dtype = jnp.dtype(x.dtype if mxu_dtype is None else mxu_dtype)

    # ---- balanced M/N tiling ------------------------------------------------
    tm = _balanced_tile(batch, tm_max, 8)          # sublane multiple
    tn = _balanced_tile(layer_width, tn_max, 128)  # lane-dense output stores
    grid_m = pl.cdiv(batch, tm)
    grid_n = pl.cdiv(layer_width, tn)

    # v7x shards the "parallel" grid axes over two TensorCores; make sure there
    # are at least 2 parallel tiles, or one core idles (no-op on v5e/v6e).
    if grid_m * grid_n == 1:
        if layer_width > 128:
            tn = _round_up(pl.cdiv(layer_width, 2), 128)
            grid_n = pl.cdiv(layer_width, tn)
        elif batch > 8:
            tm = _round_up(pl.cdiv(batch, 2), 8)
            grid_m = pl.cdiv(batch, tm)

    n_pad = grid_n * tn

    # ---- K tiling -------------------------------------------------------------
    if input_dim <= tk_max:
        tk, k_pad, grid_k = input_dim, input_dim, 1   # SWIM default: K == 2
    else:
        grid_k = pl.cdiv(input_dim, tk_max)
        tk = _round_up(pl.cdiv(input_dim, grid_k), 128)
        grid_k = pl.cdiv(input_dim, tk)
        k_pad = grid_k * tk

    # ---- one-time weight / bias preparation (cacheable: SWIM weights are ------
    # ---- static buffers set by `fit`) ------------------------------------------
    #   * transpose to (K, N): plain MN contraction, no in-kernel weight transpose
    #   * cast to mxu_dtype in HBM: halves streamed weight bytes for bf16
    #   * zero-pad K (semantically required) and N (one-time, deterministic)
    w_t = weights.T.astype(mxu_dtype)                 # (input_dim, layer_width)
    if (k_pad, n_pad) != (input_dim, layer_width):
        w_t = jnp.pad(w_t, ((0, k_pad - input_dim), (0, n_pad - layer_width)))
    b_row = biases.reshape(1, layer_width).astype(jnp.float32)
    if n_pad != layer_width:
        b_row = jnp.pad(b_row, ((0, 0), (0, n_pad - layer_width)))

    # x is never padded along M (boundary blocks are clipped on writeback);
    # K is zero-padded only on the multi-step path (garbage K would mix).
    x_p = x
    if k_pad != input_dim:
        x_p = jnp.pad(x, ((0, 0), (0, k_pad - input_dim)))

    out_shape = jax.ShapeDtypeStruct((batch, layer_width), out_dtype)

    if grid_k == 1:
        # SWIM's common regime: single K step, no accumulator scratch.
        return pl.pallas_call(
            functools.partial(_swim_kernel_single_k, mxu_dtype=mxu_dtype),
            out_shape=out_shape,
            grid=(grid_m, grid_n),
            in_specs=[
                pl.BlockSpec((tm, tk), lambda i, j: (i, 0)),   # x
                pl.BlockSpec((tk, tn), lambda i, j: (0, j)),   # weights (K, N)
                pl.BlockSpec((1, tn), lambda i, j: (0, j)),    # bias row
            ],
            out_specs=pl.BlockSpec((tm, tn), lambda i, j: (i, j)),
            compiler_params=pltpu.CompilerParams(
                dimension_semantics=("parallel", "parallel")),
        )(x_p, w_t, b_row)

    return pl.pallas_call(
        functools.partial(_swim_kernel_multi_k, mxu_dtype=mxu_dtype),
        out_shape=out_shape,
        grid=(grid_m, grid_n, grid_k),
        in_specs=[
            pl.BlockSpec((tm, tk), lambda i, j, k: (i, k)),    # x
            pl.BlockSpec((tk, tn), lambda i, j, k: (k, j)),    # weights (K, N)
            pl.BlockSpec((1, tn), lambda i, j, k: (0, j)),     # bias row
        ],
        out_specs=pl.BlockSpec((tm, tn), lambda i, j, k: (i, j)),
        scratch_shapes=[pltpu.VMEM((tm, tn), jnp.float32)],
        compiler_params=pltpu.CompilerParams(
            dimension_semantics=("parallel", "parallel", "arbitrary")),
    )(x_p, w_t, b_row)


def _reference(x, weights, biases):
    return jnp.tanh(x @ weights.T + biases.T)


if __name__ == "__main__":
    key = jax.random.PRNGKey(0)

    # --- Module-default shapes: layer_width=200, input_dimension=2 ------------
    layer_width, input_dimension, batch = 200, 2, 16
    kx, kw, kb, k2 = jax.random.split(key, 4)
    x = jax.random.normal(kx, (batch, input_dimension), dtype=jnp.float32)
    weights = jax.random.normal(kw, (layer_width, input_dimension), dtype=jnp.float32)
    biases = jax.random.normal(kb, (layer_width, 1), dtype=jnp.float32)

    out = jax.block_until_ready(swim_block_forward(x, weights, biases))
    ref = _reference(x, weights, biases)
    assert out.shape == (batch, layer_width)
    assert jnp.allclose(out, ref, atol=1e-5, rtol=1e-5), "f32 mismatch vs reference"

    # Opt-in bf16 MXU path (weights cast once in HBM, f32 accumulation).
    out_bf16 = jax.block_until_ready(
        swim_block_forward(x, weights, biases, mxu_dtype=jnp.bfloat16))
    assert jnp.allclose(out_bf16, ref, atol=2e-2, rtol=2e-2), "bf16 mismatch vs reference"

    # --- Multi-K-step path: odd batch (partial M block), layer_width not a ----
    # --- multiple of 128 (partial N block), input_dim forced onto the ---------
    # --- accumulator path (tk=256, 3 K steps). --------------------------------
    b2, l2, d2 = 13, 300, 600
    ka, kwa, kba = jax.random.split(k2, 3)
    x2 = jax.random.normal(ka, (b2, d2), dtype=jnp.float32)
    w2 = jax.random.normal(kwa, (l2, d2), dtype=jnp.float32)
    bs2 = jax.random.normal(kba, (l2, 1), dtype=jnp.float32)
    out2 = jax.block_until_ready(swim_block_forward(x2, w2, bs2, tk_max=256))
    ref2 = _reference(x2, w2, bs2)
    assert out2.shape == (b2, l2)
    assert jnp.allclose(out2, ref2, atol=1e-4, rtol=1e-4), "tiled-K mismatch vs reference"

    print("KERNEL_OK")
</pallas_src>

<mosaic_0001>
module attributes {stable_mosaic.version = 11 : i64} {
  func.func @_swim_kernel_single_k(%arg0: i32, %arg1: i32, %arg2: memref<16x2xf32, #tpu.memory_space<vmem>>, %arg3: memref<2x128xf32, #tpu.memory_space<vmem>>, %arg4: memref<1x128xf32, #tpu.memory_space<vmem>>, %arg5: memref<16x128xf32, #tpu.memory_space<vmem>>) attributes {dimension_semantics = [#tpu.dimension_semantics<parallel>, #tpu.dimension_semantics<parallel>], iteration_bounds = array<i64: 1, 2>, scalar_prefetch = 0 : i64, scratch_operands = 0 : i64, tpu.core_type = #tpu.core_type<tc>, window_params = [{transform_indices = @transform_0, window_bounds = array<i64: 16, 2>}, {transform_indices = @transform_1, window_bounds = array<i64: 2, 128>}, {transform_indices = @transform_2, window_bounds = array<i64: 1, 128>}, {transform_indices = @transform_3, window_bounds = array<i64: 16, 128>}]} {
    %c0 = arith.constant 0 : index
    %c0_0 = arith.constant 0 : index
    %0 = vector.load %arg2[%c0, %c0_0] : memref<16x2xf32, #tpu.memory_space<vmem>>, vector<16x2xf32>
    %c0_1 = arith.constant 0 : index
    %c0_2 = arith.constant 0 : index
    %1 = vector.load %arg3[%c0_1, %c0_2] : memref<2x128xf32, #tpu.memory_space<vmem>>, vector<2x128xf32>
    %cst = arith.constant dense<0.000000e+00> : vector<16x128xf32>
    %2 = tpu.matmul %0, %1, %cst {dimension_numbers = #tpu.dot_dimension_numbers<[1], [0], [0], [1], [0, 0, 1, 1], [], []>} : vector<16x2xf32>, vector<2x128xf32>, vector<16x128xf32> -> vector<16x128xf32>
    %c0_3 = arith.constant 0 : index
    %c0_4 = arith.constant 0 : index
    %3 = vector.load %arg4[%c0_3, %c0_4] : memref<1x128xf32, #tpu.memory_space<vmem>>, vector<1x128xf32>
    %4 = vector.broadcast %3 : vector<1x128xf32> to vector<16x128xf32>
    %5 = arith.addf %2, %4 : vector<16x128xf32>
    %6 = math.tanh %5 : vector<16x128xf32>
    %c0_5 = arith.constant 0 : index
    %c0_6 = arith.constant 0 : index
    %7 = vector.load %arg5[%c0_5, %c0_6] : memref<16x128xf32, #tpu.memory_space<vmem>>, vector<16x128xf32>
    tpu.vector_store %arg5[%c0_5, %c0_6], %6 {strides = array<i32>} : memref<16x128xf32, #tpu.memory_space<vmem>>, vector<16x128xf32>,
    return
  }
  func.func @transform_0(%arg0: i32, %arg1: i32) -> (i32, i32) {
    %c0_i32 = arith.constant 0 : i32
    %c0_i32_0 = arith.constant 0 : i32
    return %arg0, %c0_i32 : i32, i32
  }
  func.func @transform_1(%arg0: i32, %arg1: i32) -> (i32, i32) {
    %c0_i32 = arith.constant 0 : i32
    %c0_i32_0 = arith.constant 0 : i32
    return %c0_i32, %arg1 : i32, i32
  }
  func.func @transform_2(%arg0: i32, %arg1: i32) -> (i32, i32) {
    %c0_i32 = arith.constant 0 : i32
    %c0_i32_0 = arith.constant 0 : i32
    return %c0_i32, %arg1 : i32, i32
  }
  func.func @transform_3(%arg0: i32, %arg1: i32) -> (i32, i32) {
    %c0_i32 = arith.constant 0 : i32
    return %arg0, %arg1 : i32, i32
  }
}

</mosaic_0001>

<llo_original>
// kernel: tpu_custom_call.1
$region0: #{tpu_custom_call.1}
  #allocation0 [shape = 'u32[]', space=smem, size = 0x4, offset = 0x4, fixed_abs, tag = 'smem constant byte address 0x4 - core index']
  #allocation1 [shape = 'u32[72,128]{1,0:T(1,128)}', space=vmem, size = 0x9000, scoped, tag = 'internal scratch']
  %s0 = inlined_call_operand.vmem [shape: f32[16,2], index: 0, kind: input, shape index: {}]
  %s1 = inlined_call_operand.vmem [shape: f32[2,256], index: 1, kind: input, shape index: {}]
  %s2 = inlined_call_operand.vmem [shape: f32[1,256], index: 2, kind: input, shape index: {}]
  %s3 = inlined_call_operand.hbm [shape: f32[16,200], index: 3, kind: output, shape index: {}]
  %s4 = sld [smem:[#allocation0]]
  $region45: #{tpu_custom_call.1} parent=0
    _
  %s6 = ssub.s32 1, %s4
  %s7 = scalar_select 0, %s6, %s4
  $region1: #{tpu_custom_call.1} parent=0
    #allocation2 [shape = 'u8[16384]{0}', space=vmem, size = 0x4000, scoped, tag = 'output window, operand 0']
    #allocation3 [shape = 's32[2]{0}', space=sflag, size = 0x8, scoped, tag = 'scoped memory for tpu_custom_call.1']
    %8 = vsyncpa [#allocation3], 0
    %s9 = scalar_lea.sflag [#allocation3], 1
    %10 = vsyncpa %s9, 0
    loop: start=0, step=1, limit=4
    $region2: #{tpu_custom_call.1} parent=1 // loop_pre_header
      _
    $region3: #{tpu_custom_call.1} parent=1 // loop_header
      %s12 = sphi 0, %s16
      %p13 = scmp.ge.s32.totalorder %s12, 4
      %s19 = sphi 0, %s31
      %s20 = sphi 0, %s27
      %s21 = sphi 0, %s19
      %s22 = sphi 0, %s20
      %s23 = sphi 0, %s21
      %s24 = sphi 0, %s22
      %s34 = sphi 0, %s36
      %s37 = sphi 0, %s34
      %s38 = sphi 0, %s37
      %s54 = sphi 0, %s38
      %s60 = sphi 0, %s62
      %s63 = sphi 0, %s60
      %s64 = sphi 0, %s63
      %s80 = sphi 0, %s64
      %s86 = sphi 0, %s88
      %s89 = sphi 0, %s86
      %s90 = sphi 0, %s89
      %s106 = sphi 0, %s90
      %s114 = sphi 0, %s116
      %s117 = sphi 0, %s114
      %s118 = sphi 0, %s117
      %s134 = sphi 0, %s118
    $region4: #{tpu_custom_call.1} parent=1 // loop_header_branch
      %15 = sbr.rel (%p13) target = $region8
    $region5: #{tpu_custom_call.1} parent=1 // loop_body
      %s17 = ssub.s32 %s12, 1
      %s18 = ssub.s32 %s12, 2
      %s25 = sadd.s32 1, %s20
      %p26 = scmp.ge.s32.totalorder %s25, 2
      %s27 = scalar_select %p26, 0, %s25
      %s28 = sadd.s32 1, %s19
      %s29 = scalar_select %p26, %s28, %s19
      %p30 = scmp.ge.s32.totalorder %s29, 1
      %s31 = scalar_select %p30, 0, %s29
      %s32 = ssub.s32 %s19, %s31
      %p33 = scmp.eq.s32.totalorder %s32, 0
      %s35 = sadd.s32 %s34, 1
      %s36 = scalar_select %p33, %s34, %s35
      %p39 = pneg %p33
      %p40 = scmp.eq.s32.totalorder %s12, 1
      %p41 = por %p39, %p40
      %p42 = scmp.ne.s32.totalorder %s34, %s37
      %p43 = scmp.eq.s32.totalorder %s12, 0
      %p44 = por %p42, %p43
      %p45 = scmp.ne.s32.totalorder %s34, %s37
      %p46 = scmp.eq.s32.totalorder %s17, 1
      %p47 = por %p45, %p46
      %p48 = scmp.ne.s32.totalorder %s37, %s38
      %p49 = scmp.eq.s32.totalorder %s17, 0
      %p50 = por %p48, %p49
      %p51 = scmp.ne.s32.totalorder %s37, %s38
      %p52 = scmp.eq.s32.totalorder %s18, 1
      %p53 = por %p51, %p52
      %p55 = scmp.ne.s32.totalorder %s38, %s54
      %p56 = scmp.eq.s32.totalorder %s18, 0
      %p57 = por %p55, %p56
      %s58 = ssub.s32 %s20, %s27
      %p59 = scmp.eq.s32.totalorder %s58, 0
      %s61 = sadd.s32 %s60, 1
      %s62 = scalar_select %p59, %s60, %s61
      %p65 = pneg %p59
      %p66 = scmp.eq.s32.totalorder %s12, 1
      %p67 = por %p65, %p66
      %p68 = scmp.ne.s32.totalorder %s60, %s63
      %p69 = scmp.eq.s32.totalorder %s12, 0
      %p70 = por %p68, %p69
      %p71 = scmp.ne.s32.totalorder %s60, %s63
      %p72 = scmp.eq.s32.totalorder %s17, 1
      %p73 = por %p71, %p72
      %p74 = scmp.ne.s32.totalorder %s63, %s64
      %p75 = scmp.eq.s32.totalorder %s17, 0
      %p76 = por %p74, %p75
      %p77 = scmp.ne.s32.totalorder %s63, %s64
      %p78 = scmp.eq.s32.totalorder %s18, 1
      %p79 = por %p77, %p78
      %p81 = scmp.ne.s32.totalorder %s64, %s80
      %p82 = scmp.eq.s32.totalorder %s18, 0
      %p83 = por %p81, %p82
      %s84 = ssub.s32 %s20, %s27
      %p85 = scmp.eq.s32.totalorder %s84, 0
      %s87 = sadd.s32 %s86, 1
      %s88 = scalar_select %p85, %s86, %s87
      %p91 = pneg %p85
      %p92 = scmp.eq.s32.totalorder %s12, 1
      %p93 = por %p91, %p92
      %p94 = scmp.ne.s32.totalorder %s86, %s89
      %p95 = scmp.eq.s32.totalorder %s12, 0
      %p96 = por %p94, %p95
      %p97 = scmp.ne.s32.totalorder %s86, %s89
      %p98 = scmp.eq.s32.totalorder %s17, 1
      %p99 = por %p97, %p98
      %p100 = scmp.ne.s32.totalorder %s89, %s90
      %p101 = scmp.eq.s32.totalorder %s17, 0
      %p102 = por %p100, %p101
      %p103 = scmp.ne.s32.totalorder %s89, %s90
      %p104 = scmp.eq.s32.totalorder %s18, 1
      %p105 = por %p103, %p104
      %p107 = scmp.ne.s32.totalorder %s90, %s106
      %p108 = scmp.eq.s32.totalorder %s18, 0
      %p109 = por %p107, %p108
      %s110 = ssub.s32 %s19, %s31
      %s111 = ssub.s32 %s20, %s27
      %s112 = sor.u32 %s110, %s111
      %p113 = scmp.eq.s32.totalorder %s112, 0
      %s115 = sadd.s32 %s114, 1
      %s116 = scalar_select %p113, %s114, %s115
      %p119 = pneg %p113
      %p120 = scmp.eq.s32.totalorder %s12, 1
      %p121 = por %p119, %p120
      %p122 = scmp.ne.s32.totalorder %s114, %s117
      %p123 = scmp.eq.s32.totalorder %s12, 0
      %p124 = por %p122, %p123
      %p125 = scmp.ne.s32.totalorder %s114, %s117
      %p126 = scmp.eq.s32.totalorder %s17, 1
      %p127 = por %p125, %p126
      %p128 = scmp.ne.s32.totalorder %s117, %s118
      %p129 = scmp.eq.s32.totalorder %s17, 0
      %p130 = por %p128, %p129
      %p131 = scmp.ne.s32.totalorder %s117, %s118
      %p132 = scmp.eq.s32.totalorder %s18, 1
      %p133 = por %p131, %p132
      %p135 = scmp.ne.s32.totalorder %s118, %s134
      %p136 = scmp.eq.s32.totalorder %s18, 0
      %p137 = por %p135, %p136
      %p138 = scmp.le.s32.totalorder 1, %s12
      %p139 = scmp.lt.s32.totalorder %s12, 3
      %p140 = pnand %p138, %p139
      %p141 = pneg %p140
      // Predicated region
      $region9: #{tpu_custom_call.1} parent=5 // pred_check
        _
      $region10: #{tpu_custom_call.1} parent=5 // pred_check_branch
        %143 = sbr.rel (%p140) target = $region12
      $region11: #{tpu_custom_call.1} parent=5 // pred_region
        %s144 = ssub.s32 %s12, 1
        // Predicated region
        $region13: #{tpu_custom_call.1} parent=11 // pred_check
          %p145 = pneg %p50
        $region14: #{tpu_custom_call.1} parent=11 // pred_check_branch
          %147 = sbr.rel (%p145) target = $region16
        $region15: #{tpu_custom_call.1} parent=11 // pred_region
          %s148 = smul.u32 2, %s21
          %p149 = scmp.lt.s32.totalorder %s148, 1
          %s150 = scalar_select %p149, %s148, 1
          %s151 = smul.addr %s150, 8
          %s152 = scalar_lea.vmem %s0, %s151
          %s153 = smul.u32 2, %s21
        $region16: #{tpu_custom_call.1} parent=11 // pred_fallthru
          _
      $region12: #{tpu_custom_call.1} parent=5 // pred_fallthru
        _
      %p154 = scmp.lt.s32.totalorder %s12, 2
      // Predicated region
      $region17: #{tpu_custom_call.1} parent=5 // pred_check
        %p155 = pneg %p154
      $region18: #{tpu_custom_call.1} parent=5 // pred_check_branch
        %157 = sbr.rel (%p155) target = $region20
      $region19: #{tpu_custom_call.1} parent=5 // pred_region
        // Predicated region
        $region21: #{tpu_custom_call.1} parent=19 // pred_check
          %p158 = pneg %p70
        $region22: #{tpu_custom_call.1} parent=19 // pred_check_branch
          %160 = sbr.rel (%p158) target = $region24
        $region23: #{tpu_custom_call.1} parent=19 // pred_region
          %p161 = scmp.lt.s32.totalorder %s20, 1
          %s162 = scalar_select %p161, %s20, 1
          %s163 = smul.addr %s162, 2
          %s164 = scalar_lea.vmem %s1, %s163
        $region24: #{tpu_custom_call.1} parent=19 // pred_fallthru
          _
        // Predicated region
        $region25: #{tpu_custom_call.1} parent=19 // pred_check
          %p165 = pneg %p96
        $region26: #{tpu_custom_call.1} parent=19 // pred_check_branch
          %167 = sbr.rel (%p165) target = $region28
        $region27: #{tpu_custom_call.1} parent=19 // pred_region
          %p168 = scmp.lt.s32.totalorder %s20, 1
          %s169 = scalar_select %p168, %s20, 1
          %s170 = scalar_lea.vmem %s2, %s169
        $region28: #{tpu_custom_call.1} parent=19 // pred_fallthru
          _
      $region20: #{tpu_custom_call.1} parent=5 // pred_fallthru
        _
      %p171 = scmp.le.s32.totalorder 1, %s12
      %p172 = scmp.lt.s32.totalorder %s12, 3
      %p173 = pnand %p171, %p172
      %p174 = pneg %p173
      // Predicated region
      $region29: #{tpu_custom_call.1} parent=5 // pred_check
        _
      $region30: #{tpu_custom_call.1} parent=5 // pred_check_branch
        %176 = sbr.rel (%p173) target = $region32
      $region31: #{tpu_custom_call.1} parent=5 // pred_region
        %s177 = ssub.s32 %s12, 1
        %s178 = smul.u32 2, %s21
        %p179 = scmp.lt.s32.totalorder %s178, 1
        %s180 = scalar_select %p179, %s178, 1
        %s181 = smul.addr %s180, 8
        %s182 = scalar_lea.vmem %s0, %s181
        %p183 = pneg %p50
        %p184 = pneg %p47
        %p185 = scmp.lt.s32.totalorder %s22, 1
        %s186 = scalar_select %p185, %s22, 1
        %s187 = smul.addr %s186, 2
        %s188 = scalar_lea.vmem %s1, %s187
        %p189 = pneg %p76
        %p190 = pneg %p73
        %p191 = scmp.lt.s32.totalorder %s22, 1
        %s192 = scalar_select %p191, %s22, 1
        %s193 = scalar_lea.vmem %s2, %s192
        %p194 = pneg %p102
        %p195 = pneg %p99
        %p196 = pneg %p130
        %p197 = pneg %p127
        %s198 = sand.u32 %s117, 1
        %s199 = scalar_lea.sflag [#allocation3], %s198
        %s200 = sand.u32 %s117, 1
        %s201 = smul.addr %s200, 16
        %s202 = scalar_lea.vmem [#allocation2], %s201
        %s203 = smul.u32 2, %s21
        %p204 = scmp.lt.s32.totalorder %s203, 1
        %s205 = scalar_select %p204, %s203, 1
        %s206 = smul.addr %s205, 8
        %s207 = scalar_lea.vmem %s0, %s206
        %s208 = smul.u32 2, %s21
        %p209 = scmp.lt.s32.totalorder %s22, 1
        %s210 = scalar_select %p209, %s22, 1
        %s211 = smul.addr %s210, 2
        %s212 = scalar_lea.vmem %s1, %s211
        %p213 = scmp.lt.s32.totalorder %s22, 1
        %s214 = scalar_select %p213, %s22, 1
        %s215 = scalar_lea.vmem %s2, %s214
        %s216 = smul.u32 2, %s21
        %v217 = vld [vmem:[%s207] sm:$0xff]
        %v218 = vld [vmem:[%s207 + $0x8] sm:$0xff]
        %v219 = vld [vmem:[%s212] sm:$0x3]
        %v220 = vld [vmem:[%s215] sm:$0x1]
        %v222 = vperm.slane %v220, 0
        %vm224 = vcmask 15360
        %v226 = vsel %vm224, %v217, 0
        %v229 = vsel %vm224, %v218, 0
        %vm231 = vcmask 1041408
        %v233 = vsel %vm231, %v219, 0
        %235 = vmatpush.msra.mxu0 0.0
        %236 = vmatpush.msra.mxu0 0.0
        %237 = vmatpush.msra.mxu0 0.0
        %238 = vmatpush.msra.mxu0 0.0
        %239 = vmatpush.msra.mxu0 0.0
        %240 = vmatpush.msra.mxu0 0.0
        %241 = vmatpush.msra.mxu0 0.0
        %242 = vmatpush.msra.mxu0 0.0
        %243 = vmatpush.msra.mxu0 0.0
        %244 = vmatpush.msra.mxu0 0.0
        %245 = vmatpush.msra.mxu0 0.0
        %246 = vmatpush.msra.mxu0 0.0
        %247 = vmatpush.msra.mxu0 0.0
        %248 = vmatpush.msra.mxu0 0.0
        %249 = vmatpush.msra.mxu0 0.0
        %250 = vmatpush.msra.mxu0 %v233
        %251 = vmatmul.f32.gmra.mxu0 %v226
        %v252 = vpop.f32.mrf.mxu0
        %v253 = vadd.f32 %v222, %v252
        %254 = vmatmul.f32.gmra.mxu0 %v229
        %v255 = vpop.f32.mrf.mxu0
        %v256 = vadd.f32 %v222, %v255
        %257 = vdwg.mxu0
        %v258 = vtanh.pop %v253
        %v259 = vtanh.pop %v256
        %260 = vst [vmem:[%s202] sm:$0xff] %v258
        %261 = vst [vmem:[%s202 + $0x8] sm:$0xff] %v259
        %s262 = sand.u32 %s117, 1
        %s263 = scalar_lea.sflag [#allocation3], %s262
        %s264 = sand.u32 %s117, 1
        %s265 = smul.addr %s264, 16
        %s266 = scalar_lea.vmem [#allocation2], %s265
        // Predicated region
        $region33: #{tpu_custom_call.1} parent=31 // pred_check
          %p267 = pneg %p127
        $region34: #{tpu_custom_call.1} parent=31 // pred_check_branch
          %269 = sbr.rel (%p267) target = $region36
        $region35: #{tpu_custom_call.1} parent=31 // pred_region
          %s270 = smul.u32 2, %s21
          %272 = vsyncadd %s263, 0
          %s273 = smul.addr %s270, 2
          %s274 = sadd.s32 %s22, %s273
          %s275 = smul.addr %s274, 8
          %s276 = scalar_lea.hbm %s3, %s275
          %s277 = sshll.u32 %s266, 4
          %s278 = int_to_ptr.vmem [resolvable:$true] %s277
          %s279 = sshll.u32 %s276, 4
          %s280 = int_to_ptr.hbm [resolvable:$true] %s279
          %285 = dma.vmem_to_hbm [thread:$0]  %s278, 256, %s280, %s263, 128, 256, 8
        $region36: #{tpu_custom_call.1} parent=31 // pred_fallthru
          _
      $region32: #{tpu_custom_call.1} parent=5 // pred_fallthru
        _
      %p286 = scmp.le.s32.totalorder 2, %s12
      // Predicated region
      $region37: #{tpu_custom_call.1} parent=5 // pred_check
        %p287 = pneg %p286
      $region38: #{tpu_custom_call.1} parent=5 // pred_check_branch
        %289 = sbr.rel (%p287) target = $region40
      $region39: #{tpu_custom_call.1} parent=5 // pred_region
        %s290 = ssub.s32 %s12, 2
        // Predicated region
        $region41: #{tpu_custom_call.1} parent=39 // pred_check
          %p291 = pneg %p133
        $region42: #{tpu_custom_call.1} parent=39 // pred_check_branch
          %293 = sbr.rel (%p291) target = $region44
        $region43: #{tpu_custom_call.1} parent=39 // pred_region
          %s294 = sand.u32 %s118, 1
          %s295 = scalar_lea.sflag [#allocation3], %s294
          %s296 = sand.u32 %s118, 1
          %s297 = smul.addr %s296, 16
          %s298 = scalar_lea.vmem [#allocation2], %s297
          %300 = dma.done %s295, 256
        $region44: #{tpu_custom_call.1} parent=39 // pred_fallthru
          _
      $region40: #{tpu_custom_call.1} parent=5 // pred_fallthru
        _
    $region6: #{tpu_custom_call.1} parent=1 // loop_footer
      %s16 = sadd.s32 1, %s12
    $region7: #{tpu_custom_call.1} parent=1 // loop_footer_branch
      %11 = sbr.rel target = $region3
    $region8: #{tpu_custom_call.1} parent=1 // loop_exit
      _
    %301 = vsyncpa [#allocation3], 1
    %s302 = scalar_lea.sflag [#allocation3], 1
    %303 = vsyncpa %s302, 1

</llo_original>
